<compile_context>
chip_gen: v6e
topology: v6e:2x2x1
jax: 0.10.0
libtpu: 0.0.40
codegen_flags: <defaults>
</compile_context>

<pallas_src>
import functools

import jax
import jax.numpy as jnp
from jax import lax
from jax.experimental import pallas as pl
from jax.experimental.pallas import tpu as pltpu


def _make_kernel(H2, W2, Cin, Cout, double):
    C4 = 4 * Cin

    def kernel(*refs):
        if double:
            (x_ref, s1_ref, b1_ref, w4_ref, s2_ref, b2_ref, w2_ref,
             o_ref, ppad_ref, slab1_ref, pad2_ref, slab2_ref) = refs
        else:
            (x_ref, s1_ref, b1_ref, w4_ref, o_ref, ppad_ref, slab1_ref) = refs

        # ---- stage 1: BN1 (folded affine) + ReLU on the parity-packed input ----
        # x_ref[0]: (H2, W2, 4*Cin); channel block p*2+q holds x[p::2, q::2, :].
        act = jnp.maximum(x_ref[0] * s1_ref[...] + b1_ref[...], 0.0)

        # Zero only the 1-wide borders of the packed padded buffer; the interior is
        # fully rewritten below.  Re-done each step so it is correct for any grid
        # scheduling (incl. megacore sharding of the batch axis); cost is negligible.
        zr = jnp.zeros((1, W2 + 1, C4), jnp.float32)
        zc = jnp.zeros((H2 + 1, 1, C4), jnp.float32)
        ppad_ref[pl.ds(0, 1), pl.ds(0, W2 + 1), :] = zr
        ppad_ref[pl.ds(H2, 1), pl.ds(0, W2 + 1), :] = zr
        ppad_ref[pl.ds(0, H2 + 1), pl.ds(0, 1), :] = zc
        ppad_ref[pl.ds(0, H2 + 1), pl.ds(W2, 1), :] = zc

        # Scatter the four parity blocks of the zero-padded activation:
        #   ppad[I, J, (pa*2+pb)*Cin : +Cin] = act_padded[2*I + pa, 2*J + pb, :]
        ppad_ref[pl.ds(1, H2), pl.ds(1, W2), pl.ds(0 * Cin, Cin)] = act[:, :, 3 * Cin:4 * Cin]
        ppad_ref[pl.ds(1, H2), pl.ds(0, W2), pl.ds(1 * Cin, Cin)] = act[:, :, 2 * Cin:3 * Cin]
        ppad_ref[pl.ds(0, H2), pl.ds(1, W2), pl.ds(2 * Cin, Cin)] = act[:, :, 1 * Cin:2 * Cin]
        ppad_ref[pl.ds(0, H2), pl.ds(0, W2), pl.ds(3 * Cin, Cin)] = act[:, :, 0 * Cin:1 * Cin]

        # ---- conv1(3x3,s1,p1) + avgpool(2x2) fused as a 4x4/stride-2 conv:
        #      one im2col matmul with K = 16*Cin ----
        for t, (du, dv) in enumerate(((0, 0), (0, 1), (1, 0), (1, 1))):
            slab1_ref[pl.ds(0, H2), pl.ds(0, W2), pl.ds(t * C4, C4)] = \
                ppad_ref[pl.ds(du, H2), pl.ds(dv, W2), :]
        patches1 = slab1_ref[...].reshape(H2 * W2, 4 * C4).astype(jnp.bfloat16)
        y = jnp.dot(patches1, w4_ref[...],
                    preferred_element_type=jnp.float32)          # (H2*W2, Cout) f32

        if double:
            # ---- stage 2: BN2 + ReLU, then conv2(3x3,s1,p1) as one K = 9*Cout matmul ----
            act2 = jnp.maximum(y * s2_ref[...] + b2_ref[...], 0.0)
            z2r = jnp.zeros((1, W2 + 2, Cout), jnp.float32)
            z2c = jnp.zeros((H2 + 2, 1, Cout), jnp.float32)
            pad2_ref[pl.ds(0, 1), pl.ds(0, W2 + 2), :] = z2r
            pad2_ref[pl.ds(H2 + 1, 1), pl.ds(0, W2 + 2), :] = z2r
            pad2_ref[pl.ds(0, H2 + 2), pl.ds(0, 1), :] = z2c
            pad2_ref[pl.ds(0, H2 + 2), pl.ds(W2 + 1, 1), :] = z2c
            pad2_ref[pl.ds(1, H2), pl.ds(1, W2), :] = act2.reshape(H2, W2, Cout)

            for t in range(9):
                dy, dx = t // 3, t % 3
                slab2_ref[pl.ds(0, H2), pl.ds(0, W2), pl.ds(t * Cout, Cout)] = \
                    pad2_ref[pl.ds(dy, H2), pl.ds(dx, W2), :]
            patches2 = slab2_ref[...].reshape(H2 * W2, 9 * Cout).astype(jnp.bfloat16)
            o_ref[0] = jnp.dot(patches2, w2_ref[...],
                               preferred_element_type=jnp.float32)
        else:
            o_ref[0] = y

    return kernel


def _fold_bn(gamma, beta, mean, var, eps=1e-5):
    scale = gamma / jnp.sqrt(var + eps)
    bias = beta - mean * scale
    return scale, bias


@functools.partial(jax.jit, static_argnames=("double", "pool", "eps"))
def downsample_a(x_nchw, params, *, double=False, pool="avg", eps=1e-5):
    """DownSampleA forward. Input NCHW, output NCHW (N, Cout, H//2, W//2)."""
    if pool != "avg":
        # TODO(synk): MaxPool2d(2) variant is not fused into the Pallas kernel.
        raise NotImplementedError("only pool='avg' is implemented in the Pallas kernel")

    N, Cin, H, W = x_nchw.shape
    assert H % 2 == 0 and W % 2 == 0, "spatial dims must be even for the 2x2 pool"
    H2, W2 = H // 2, W // 2
    Cout = params["w1"].shape[0]
    C4 = 4 * Cin

    # Parity-packed NHWC input: (N, H2, W2, 4*Cin); channel block p*2+q = x[p::2, q::2].
    # This is a single XLA transpose pass (same cost class as a plain NCHW->NHWC copy).
    x = jnp.transpose(x_nchw, (0, 2, 3, 1)).astype(jnp.float32)
    x = x.reshape(N, H2, 2, W2, 2, Cin).transpose(0, 1, 3, 2, 4, 5).reshape(N, H2, W2, C4)

    s1, b1 = _fold_bn(params["bn1_gamma"], params["bn1_beta"],
                      params["bn1_mean"], params["bn1_var"], eps)
    s1p = jnp.tile(s1, 4).reshape(1, 1, C4).astype(jnp.float32)
    b1p = jnp.tile(b1, 4).reshape(1, 1, C4).astype(jnp.float32)

    # Fold conv1(3x3,s1,p1) + avgpool(2x2) into one 4x4/stride-2 kernel W4 and lay it
    # out as a (16*Cin, Cout) matrix matching the in-kernel im2col column order.
    w1_hwio = jnp.transpose(params["w1"], (2, 3, 1, 0)).astype(jnp.float32)  # (3,3,Cin,Cout)
    w4 = jnp.zeros((4, 4, Cin, Cout), jnp.float32)
    for a in (0, 1):
        for b in (0, 1):
            w4 = w4.at[a:a + 3, b:b + 3].add(0.25 * w1_hwio)
    w4 = (w4.reshape(2, 2, 2, 2, Cin, Cout)          # (du, pa, dv, pb, c, o)
            .transpose(0, 2, 1, 3, 4, 5)             # (du, dv, pa, pb, c, o)
            .reshape(16 * Cin, Cout)
            .astype(jnp.bfloat16))

    inputs = [x, s1p, b1p, w4]
    in_specs = [
        pl.BlockSpec((1, H2, W2, C4), lambda n: (n, 0, 0, 0)),
        pl.BlockSpec((1, 1, C4), lambda n: (0, 0, 0)),
        pl.BlockSpec((1, 1, C4), lambda n: (0, 0, 0)),
        pl.BlockSpec((16 * Cin, Cout), lambda n: (0, 0)),
    ]
    scratch = [
        pltpu.VMEM((H2 + 1, W2 + 1, C4), jnp.float32),   # packed, zero-padded act1
        pltpu.VMEM((H2, W2, 16 * Cin), jnp.float32),     # stage-1 im2col slab
    ]
    if double:
        s2, b2 = _fold_bn(params["bn2_gamma"], params["bn2_beta"],
                          params["bn2_mean"], params["bn2_var"], eps)
        s2 = s2.reshape(1, Cout).astype(jnp.float32)
        b2 = b2.reshape(1, Cout).astype(jnp.float32)
        w2 = (jnp.transpose(params["w2"], (2, 3, 1, 0))  # (3,3,Cout,Cout)
                .reshape(9 * Cout, Cout).astype(jnp.bfloat16))
        inputs += [s2, b2, w2]
        in_specs += [
            pl.BlockSpec((1, Cout), lambda n: (0, 0)),
            pl.BlockSpec((1, Cout), lambda n: (0, 0)),
            pl.BlockSpec((9 * Cout, Cout), lambda n: (0, 0)),
        ]
        scratch += [
            pltpu.VMEM((H2 + 2, W2 + 2, Cout), jnp.float32),  # zero-padded act2
            pltpu.VMEM((H2, W2, 9 * Cout), jnp.float32),      # stage-2 im2col slab
        ]

    out_flat = pl.pallas_call(
        _make_kernel(H2, W2, Cin, Cout, double),
        out_shape=jax.ShapeDtypeStruct((N, H2 * W2, Cout), jnp.float32),
        grid_spec=pltpu.PrefetchScalarGridSpec(
            num_scalar_prefetch=0,
            grid=(N,),
            in_specs=in_specs,
            out_specs=pl.BlockSpec((1, H2 * W2, Cout), lambda n: (n, 0, 0)),
            scratch_shapes=scratch,
        ),
        compiler_params=pltpu.CompilerParams(dimension_semantics=("parallel",)),
    )(*inputs)

    out = out_flat.reshape(N, H2, W2, Cout)
    return jnp.transpose(out, (0, 3, 1, 2))   # back to NCHW


def _ref_forward(x_nchw, params, *, double=False, eps=1e-5):
    def bn(x, g, b, m, v):
        g, b, m, v = (t[None, :, None, None] for t in (g, b, m, v))
        return (x - m) / jnp.sqrt(v + eps) * g + b

    a1 = jnp.maximum(bn(x_nchw, params["bn1_gamma"], params["bn1_beta"],
                        params["bn1_mean"], params["bn1_var"]), 0.0)
    y1 = lax.conv_general_dilated(a1, params["w1"], window_strides=(1, 1),
                                  padding=((1, 1), (1, 1)),
                                  dimension_numbers=("NCHW", "OIHW", "NCHW"))
    n, c, h, w = y1.shape
    y = y1.reshape(n, c, h // 2, 2, w // 2, 2).mean(axis=(3, 5))   # AvgPool2d(2)
    if double:
        a2 = jnp.maximum(bn(y, params["bn2_gamma"], params["bn2_beta"],
                            params["bn2_mean"], params["bn2_var"]), 0.0)
        y = lax.conv_general_dilated(a2, params["w2"], window_strides=(1, 1),
                                     padding=((1, 1), (1, 1)),
                                     dimension_numbers=("NCHW", "OIHW", "NCHW"))
    return y


if __name__ == "__main__":
    N, Cin, Cout, H, W = 2, 4, 8, 16, 16
    ks = jax.random.split(jax.random.PRNGKey(0), 11)
    params = {
        "bn1_gamma": jax.random.uniform(ks[0], (Cin,), jnp.float32, 0.5, 1.5),
        "bn1_beta":  jax.random.normal(ks[1], (Cin,), jnp.float32) * 0.1,
        "bn1_mean":  jax.random.normal(ks[2], (Cin,), jnp.float32) * 0.1,
        "bn1_var":   jax.random.uniform(ks[3], (Cin,), jnp.float32, 0.5, 1.5),
        "w1": jax.random.normal(ks[4], (Cout, Cin, 3, 3), jnp.float32) / (Cin * 9) ** 0.5,
        "bn2_gamma": jax.random.uniform(ks[5], (Cout,), jnp.float32, 0.5, 1.5),
        "bn2_beta":  jax.random.normal(ks[6], (Cout,), jnp.float32) * 0.1,
        "bn2_mean":  jax.random.normal(ks[7], (Cout,), jnp.float32) * 0.1,
        "bn2_var":   jax.random.uniform(ks[8], (Cout,), jnp.float32, 0.5, 1.5),
        "w2": jax.random.normal(ks[9], (Cout, Cout, 3, 3), jnp.float32) / (Cout * 9) ** 0.5,
    }
    x = jax.random.normal(ks[10], (N, Cin, H, W), jnp.float32)

    for double in (False, True):
        out = jax.block_until_ready(downsample_a(x, params, double=double))
        assert out.shape == (N, Cout, H // 2, W // 2), out.shape
        ref = _ref_forward(x, params, double=double)
        max_err = float(jnp.max(jnp.abs(out - ref)))
        assert jnp.allclose(out, ref, atol=3e-2, rtol=3e-2), (double, max_err)

    print("KERNEL_OK")
</pallas_src>

<mosaic_0001>
module attributes {stable_mosaic.version = 11 : i64} {
  func.func @kernel(%arg0: i32, %arg1: memref<1x8x8x16xf32, #tpu.memory_space<vmem>>, %arg2: memref<1x1x16xf32, #tpu.memory_space<vmem>>, %arg3: memref<1x1x16xf32, #tpu.memory_space<vmem>>, %arg4: memref<64x8xbf16, #tpu.memory_space<vmem>>, %arg5: memref<1x64x8xf32, #tpu.memory_space<vmem>>, %arg6: memref<9x9x16xf32, #tpu.memory_space<vmem>>, %arg7: memref<8x8x64xf32, #tpu.memory_space<vmem>>) attributes {dimension_semantics = [#tpu.dimension_semantics<parallel>], iteration_bounds = array<i64: 2>, scalar_prefetch = 0 : i64, scratch_operands = 2 : i64, tpu.core_type = #tpu.core_type<tc>, window_params = [{transform_indices = @transform_0, window_bounds = array<i64: 1, 8, 8, 16>}, {pipeline_mode = #tpu.pipeline_mode<synchronous>, transform_indices = @transform_1, window_bounds = array<i64: 1, 1, 16>}, {pipeline_mode = #tpu.pipeline_mode<synchronous>, transform_indices = @transform_2, window_bounds = array<i64: 1, 1, 16>}, {pipeline_mode = #tpu.pipeline_mode<synchronous>, transform_indices = @transform_3, window_bounds = array<i64: 64, 8>}, {transform_indices = @transform_4, window_bounds = array<i64: 1, 64, 8>}]} {
    %c0 = arith.constant 0 : index
    %c0_0 = arith.constant 0 : index
    %c0_1 = arith.constant 0 : index
    %c0_2 = arith.constant 0 : index
    %0 = vector.load %arg1[%c0, %c0_0, %c0_1, %c0_2] : memref<1x8x8x16xf32, #tpu.memory_space<vmem>>, vector<1x8x8x16xf32>
    %1 = vector.shape_cast %0 : vector<1x8x8x16xf32> to vector<8x8x16xf32>
    %c0_3 = arith.constant 0 : index
    %c0_4 = arith.constant 0 : index
    %c0_5 = arith.constant 0 : index
    %2 = vector.load %arg2[%c0_3, %c0_4, %c0_5] : memref<1x1x16xf32, #tpu.memory_space<vmem>>, vector<1x1x16xf32>
    %3 = vector.broadcast %2 : vector<1x1x16xf32> to vector<8x8x16xf32>
    %4 = arith.mulf %1, %3 : vector<8x8x16xf32>
    %c0_6 = arith.constant 0 : index
    %c0_7 = arith.constant 0 : index
    %c0_8 = arith.constant 0 : index
    %5 = vector.load %arg3[%c0_6, %c0_7, %c0_8] : memref<1x1x16xf32, #tpu.memory_space<vmem>>, vector<1x1x16xf32>
    %6 = vector.broadcast %5 : vector<1x1x16xf32> to vector<8x8x16xf32>
    %7 = arith.addf %4, %6 : vector<8x8x16xf32>
    %cst = arith.constant 0.000000e+00 : f32
    %8 = vector.broadcast %cst : f32 to vector<8x8x16xf32>
    %9 = arith.maximumf %7, %8 : vector<8x8x16xf32>
    %cst_9 = arith.constant 0.000000e+00 : f32
    %10 = vector.broadcast %cst_9 : f32 to vector<1x9x16xf32>
    %cst_10 = arith.constant 0.000000e+00 : f32
    %11 = vector.broadcast %cst_10 : f32 to vector<9x1x16xf32>
    %c0_11 = arith.constant 0 : index
    %c0_12 = arith.constant 0 : index
    %c0_13 = arith.constant 0 : index
    %12 = vector.load %arg6[%c0_11, %c0_12, %c0_13] : memref<9x9x16xf32, #tpu.memory_space<vmem>>, vector<1x9x16xf32>
    tpu.vector_store %arg6[%c0_11, %c0_12, %c0_13], %10 {strides = array<i32>} : memref<9x9x16xf32, #tpu.memory_space<vmem>>, vector<1x9x16xf32>,
    %c8 = arith.constant 8 : index
    %c0_14 = arith.constant 0 : index
    %c0_15 = arith.constant 0 : index
    %13 = vector.load %arg6[%c8, %c0_14, %c0_15] : memref<9x9x16xf32, #tpu.memory_space<vmem>>, vector<1x9x16xf32>
    tpu.vector_store %arg6[%c8, %c0_14, %c0_15], %10 {strides = array<i32>} : memref<9x9x16xf32, #tpu.memory_space<vmem>>, vector<1x9x16xf32>,
    %c0_16 = arith.constant 0 : index
    %c0_17 = arith.constant 0 : index
    %c0_18 = arith.constant 0 : index
    %14 = vector.load %arg6[%c0_16, %c0_17, %c0_18] : memref<9x9x16xf32, #tpu.memory_space<vmem>>, vector<9x1x16xf32>
    tpu.vector_store %arg6[%c0_16, %c0_17, %c0_18], %11 {strides = array<i32>} : memref<9x9x16xf32, #tpu.memory_space<vmem>>, vector<9x1x16xf32>,
    %c0_19 = arith.constant 0 : index
    %c8_20 = arith.constant 8 : index
    %c0_21 = arith.constant 0 : index
    %15 = vector.load %arg6[%c0_19, %c8_20, %c0_21] : memref<9x9x16xf32, #tpu.memory_space<vmem>>, vector<9x1x16xf32>
    tpu.vector_store %arg6[%c0_19, %c8_20, %c0_21], %11 {strides = array<i32>} : memref<9x9x16xf32, #tpu.memory_space<vmem>>, vector<9x1x16xf32>,
    %16 = vector.extract_strided_slice %9 {offsets = [0, 0, 12], sizes = [8, 8, 4], strides = [1, 1, 1]} : vector<8x8x16xf32> to vector<8x8x4xf32>
    %c1 = arith.constant 1 : index
    %c1_22 = arith.constant 1 : index
    %c0_23 = arith.constant 0 : index
    %17 = vector.load %arg6[%c1, %c1_22, %c0_23] : memref<9x9x16xf32, #tpu.memory_space<vmem>>, vector<8x8x4xf32>
    tpu.vector_store %arg6[%c1, %c1_22, %c0_23], %16 {strides = array<i32>} : memref<9x9x16xf32, #tpu.memory_space<vmem>>, vector<8x8x4xf32>,
    %18 = vector.extract_strided_slice %9 {offsets = [0, 0, 8], sizes = [8, 8, 4], strides = [1, 1, 1]} : vector<8x8x16xf32> to vector<8x8x4xf32>
    %c1_24 = arith.constant 1 : index
    %c0_25 = arith.constant 0 : index
    %c4 = arith.constant 4 : index
    %19 = vector.load %arg6[%c1_24, %c0_25, %c4] : memref<9x9x16xf32, #tpu.memory_space<vmem>>, vector<8x8x4xf32>
    tpu.vector_store %arg6[%c1_24, %c0_25, %c4], %18 {strides = array<i32>} : memref<9x9x16xf32, #tpu.memory_space<vmem>>, vector<8x8x4xf32>,
    %20 = vector.extract_strided_slice %9 {offsets = [0, 0, 4], sizes = [8, 8, 4], strides = [1, 1, 1]} : vector<8x8x16xf32> to vector<8x8x4xf32>
    %c0_26 = arith.constant 0 : index
    %c1_27 = arith.constant 1 : index
    %c8_28 = arith.constant 8 : index
    %21 = vector.load %arg6[%c0_26, %c1_27, %c8_28] : memref<9x9x16xf32, #tpu.memory_space<vmem>>, vector<8x8x4xf32>
    tpu.vector_store %arg6[%c0_26, %c1_27, %c8_28], %20 {strides = array<i32>} : memref<9x9x16xf32, #tpu.memory_space<vmem>>, vector<8x8x4xf32>,
    %22 = vector.extract_strided_slice %9 {offsets = [0, 0, 0], sizes = [8, 8, 4], strides = [1, 1, 1]} : vector<8x8x16xf32> to vector<8x8x4xf32>
    %c0_29 = arith.constant 0 : index
    %c0_30 = arith.constant 0 : index
    %c12 = arith.constant 12 : index
    %23 = vector.load %arg6[%c0_29, %c0_30, %c12] : memref<9x9x16xf32, #tpu.memory_space<vmem>>, vector<8x8x4xf32>
    tpu.vector_store %arg6[%c0_29, %c0_30, %c12], %22 {strides = array<i32>} : memref<9x9x16xf32, #tpu.memory_space<vmem>>, vector<8x8x4xf32>,
    %c0_31 = arith.constant 0 : index
    %c0_32 = arith.constant 0 : index
    %c0_33 = arith.constant 0 : index
    %24 = vector.load %arg6[%c0_31, %c0_32, %c0_33] : memref<9x9x16xf32, #tpu.memory_space<vmem>>, vector<8x8x16xf32>
    %c0_34 = arith.constant 0 : index
    %c0_35 = arith.constant 0 : index
    %c0_36 = arith.constant 0 : index
    %25 = vector.load %arg7[%c0_34, %c0_35, %c0_36] : memref<8x8x64xf32, #tpu.memory_space<vmem>>, vector<8x8x16xf32>
    tpu.vector_store %arg7[%c0_34, %c0_35, %c0_36], %24 {strides = array<i32>} : memref<8x8x64xf32, #tpu.memory_space<vmem>>, vector<8x8x16xf32>,
    %c0_37 = arith.constant 0 : index
    %c1_38 = arith.constant 1 : index
    %c0_39 = arith.constant 0 : index
    %26 = vector.load %arg6[%c0_37, %c1_38, %c0_39] : memref<9x9x16xf32, #tpu.memory_space<vmem>>, vector<8x8x16xf32>
    %c0_40 = arith.constant 0 : index
    %c0_41 = arith.constant 0 : index
    %c16 = arith.constant 16 : index
    %27 = vector.load %arg7[%c0_40, %c0_41, %c16] : memref<8x8x64xf32, #tpu.memory_space<vmem>>, vector<8x8x16xf32>
    tpu.vector_store %arg7[%c0_40, %c0_41, %c16], %26 {strides = array<i32>} : memref<8x8x64xf32, #tpu.memory_space<vmem>>, vector<8x8x16xf32>,
    %c1_42 = arith.constant 1 : index
    %c0_43 = arith.constant 0 : index
    %c0_44 = arith.constant 0 : index
    %28 = vector.load %arg6[%c1_42, %c0_43, %c0_44] : memref<9x9x16xf32, #tpu.memory_space<vmem>>, vector<8x8x16xf32>
    %c0_45 = arith.constant 0 : index
    %c0_46 = arith.constant 0 : index
    %c32 = arith.constant 32 : index
    %29 = vector.load %arg7[%c0_45, %c0_46, %c32] : memref<8x8x64xf32, #tpu.memory_space<vmem>>, vector<8x8x16xf32>
    tpu.vector_store %arg7[%c0_45, %c0_46, %c32], %28 {strides = array<i32>} : memref<8x8x64xf32, #tpu.memory_space<vmem>>, vector<8x8x16xf32>,
    %c1_47 = arith.constant 1 : index
    %c1_48 = arith.constant 1 : index
    %c0_49 = arith.constant 0 : index
    %30 = vector.load %arg6[%c1_47, %c1_48, %c0_49] : memref<9x9x16xf32, #tpu.memory_space<vmem>>, vector<8x8x16xf32>
    %c0_50 = arith.constant 0 : index
    %c0_51 = arith.constant 0 : index
    %c48 = arith.constant 48 : index
    %31 = vector.load %arg7[%c0_50, %c0_51, %c48] : memref<8x8x64xf32, #tpu.memory_space<vmem>>, vector<8x8x16xf32>
    tpu.vector_store %arg7[%c0_50, %c0_51, %c48], %30 {strides = array<i32>} : memref<8x8x64xf32, #tpu.memory_space<vmem>>, vector<8x8x16xf32>,
    %c0_52 = arith.constant 0 : index
    %c0_53 = arith.constant 0 : index
    %c0_54 = arith.constant 0 : index
    %32 = vector.load %arg7[%c0_52, %c0_53, %c0_54] : memref<8x8x64xf32, #tpu.memory_space<vmem>>, vector<8x8x64xf32>
    %33 = vector.shape_cast %32 : vector<8x8x64xf32> to vector<64x64xf32>
    %34 = arith.truncf %33 : vector<64x64xf32> to vector<64x64xbf16>
    %c0_55 = arith.constant 0 : index
    %c0_56 = arith.constant 0 : index
    %35 = vector.load %arg4[%c0_55, %c0_56] : memref<64x8xbf16, #tpu.memory_space<vmem>>, vector<64x8xbf16>
    %cst_57 = arith.constant dense<0.000000e+00> : vector<64x8xf32>
    %36 = tpu.matmul %34, %35, %cst_57 {dimension_numbers = #tpu.dot_dimension_numbers<[1], [0], [0], [1], [0, 0, 1, 1], [], []>} : vector<64x64xbf16>, vector<64x8xbf16>, vector<64x8xf32> -> vector<64x8xf32>
    %c0_58 = arith.constant 0 : index
    %c0_59 = arith.constant 0 : index
    %c0_60 = arith.constant 0 : index
    %37 = vector.load %arg5[%c0_58, %c0_59, %c0_60] : memref<1x64x8xf32, #tpu.memory_space<vmem>>, vector<1x64x8xf32>
    %38 = vector.shape_cast %37 : vector<1x64x8xf32> to vector<64x8xf32>
    %39 = vector.shape_cast %36 : vector<64x8xf32> to vector<1x64x8xf32>
    tpu.vector_store %arg5[%c0_58, %c0_59, %c0_60], %39 {strides = array<i32>} : memref<1x64x8xf32, #tpu.memory_space<vmem>>, vector<1x64x8xf32>,
    return
  }
  func.func @transform_0(%arg0: i32) -> (i32, i32, i32, i32) {
    %c0_i32 = arith.constant 0 : i32
    %c0_i32_0 = arith.constant 0 : i32
    %c0_i32_1 = arith.constant 0 : i32
    %c0_i32_2 = arith.constant 0 : i32
    return %arg0, %c0_i32, %c0_i32_0, %c0_i32_1 : i32, i32, i32, i32
  }
  func.func @transform_1(%arg0: i32) -> (i32, i32, i32) {
    %c0_i32 = arith.constant 0 : i32
    %c0_i32_0 = arith.constant 0 : i32
    %c0_i32_1 = arith.constant 0 : i32
    %c0_i32_2 = arith.constant 0 : i32
    return %c0_i32, %c0_i32_0, %c0_i32_1 : i32, i32, i32
  }
  func.func @transform_2(%arg0: i32) -> (i32, i32, i32) {
    %c0_i32 = arith.constant 0 : i32
    %c0_i32_0 = arith.constant 0 : i32
    %c0_i32_1 = arith.constant 0 : i32
    %c0_i32_2 = arith.constant 0 : i32
    return %c0_i32, %c0_i32_0, %c0_i32_1 : i32, i32, i32
  }
  func.func @transform_3(%arg0: i32) -> (i32, i32) {
    %c0_i32 = arith.constant 0 : i32
    %c0_i32_0 = arith.constant 0 : i32
    %c0_i32_1 = arith.constant 0 : i32
    return %c0_i32, %c0_i32_0 : i32, i32
  }
  func.func @transform_4(%arg0: i32) -> (i32, i32, i32) {
    %c0_i32 = arith.constant 0 : i32
    %c0_i32_0 = arith.constant 0 : i32
    %c0_i32_1 = arith.constant 0 : i32
    return %arg0, %c0_i32, %c0_i32_0 : i32, i32, i32
  }
}

</mosaic_0001>

<llo_original>
// kernel: tile.13
$region0: #{tile.13}
  #allocation0 [shape = 's32[1]{0}', space=sflag, size = 0x4, scoped, tag = 'scoped memory for tile.13']
  %s0 = inlined_call_operand.vmem [shape: f32[4], index: 0, kind: input, shape index: {}]
  %s1 = inlined_call_operand.vmem [shape: f32[4,4], index: 1, kind: output, shape index: {}]
  // Predicated region
  $region2: #{tile.13} parent=0 // pred_check
    _
  $region3: #{tile.13} parent=0 // pred_check_branch
    %3 = sbr.rel (0) target = $region5
  $region4: #{tile.13} parent=0 // pred_region
    _
  $region5: #{tile.13} parent=0 // pred_fallthru
    _
  %v4 = vld [vmem:[%s0] ss:$0 sm:$0xff]
  %5 = vst [vmem:[%s1] sm:$0xf] %v4

// kernel: tile.14
$region0: #{tile.14}
  %s0 = inlined_call_operand.vmem [shape: f32[4,4], index: 0, kind: input, shape index: {}]
  %s1 = inlined_call_operand.vmem [shape: f32[1,1,16], index: 1, kind: output, shape index: {}]
  $region1: #{tile.14} parent=0
    #allocation0 [shape = 'u8[4096]{0}', space=vmem, size = 0x1000, scoped, tag = 'scoped mem for output reshape']
    #allocation1 [shape = 'u8[4096]{0}', space=vmem, size = 0x1000, scoped, tag = 'scoped mem for input reshape']
    %s3 = sshll.u32 1, 4
    %s4 = ssub.s32 %s3, 1
    %v5 = vld [vmem:[%s0] sm:%s4]
    %6 = vst [vmem:[#allocation1] sm:%s4] %v5
    %v7 = vld [vmem:[#allocation1] sm:$0x1]
    %vm8 = vcmask 31744
    %9 = vst.msk [vmem:[#allocation0] sm:$0x1] %vm8, %v7
    %s10 = scalar_lea.vmem [#allocation1], 3
    %v11 = vld [vmem:[%s10] sm:$0x1]
    %12 = vrot.lane.b32.xlu0 %v11, 12
    %v13 = vpop.permute.xlu0 %12
    %vm14 = vcmask 130144
    %15 = vst.msk [vmem:[#allocation0] sm:$0x1] %vm14, %v13
    %s16 = scalar_lea.vmem [#allocation1], 2
    %v17 = vld [vmem:[%s16] sm:$0x1]
    %18 = vrot.lane.b32.xlu0 %v17, 8
    %v19 = vpop.permute.xlu0 %18
    %vm20 = vcmask 97344
    %21 = vst.msk [vmem:[#allocation0] sm:$0x1] %vm20, %v19
    %s22 = scalar_lea.vmem [#allocation1], 1
    %v23 = vld [vmem:[%s22] sm:$0x1]
    %24 = vrot.lane.b32.xlu0 %v23, 4
    %v25 = vpop.permute.xlu0 %24
    %vm26 = vcmask 64544
    %27 = vst.msk [vmem:[#allocation0] sm:$0x1] %vm26, %v25
    %s29 = sshll.u32 1, 1
    %s30 = ssub.s32 %s29, 1
    %v32 = vld [vmem:[#allocation0] sm:%s30]
    %s33 = sshll.u32 1, 1
    %s34 = ssub.s32 %s33, 1
    %35 = vst [vmem:[%s1] sm:%s34] %v32

// kernel: downsample_a.1
$region0: #{downsample_a.1}
  #allocation0 [shape = 'u32[]', space=smem, size = 0x4, offset = 0x4, fixed_abs, tag = 'smem constant byte address 0x4 - core index']
  #allocation1 [shape = 'u32[144,128]{1,0:T(1,128)}', space=vmem, size = 0x12000, scoped, tag = 'internal scratch']
  #allocation2 [shape = 'f32[9,9,16]{2,1,0:T(8,128)}', space=vmem, size = 0x12000, scoped, tag = 'scratch operand']
  #allocation3 [shape = 'f32[8,8,64]{2,1,0:T(8,128)}', space=vmem, size = 0x8000, scoped, tag = 'scratch operand']
  %s0 = inlined_call_operand.vmem [shape: f32[2,8,8,16], index: 0, kind: input, shape index: {}]
  %s1 = inlined_call_operand.vmem [shape: f32[1,1,16], index: 1, kind: input, shape index: {}]
  %s2 = inlined_call_operand.vmem [shape: f32[1,1,16], index: 2, kind: input, shape index: {}]
  %s3 = inlined_call_operand.vmem [shape: bf16[64,8], index: 3, kind: input, shape index: {}]
  %s4 = inlined_call_operand.vmem [shape: f32[2,64,8], index: 4, kind: output, shape index: {}]
  %s5 = sld [smem:[#allocation0]]
  $region49: #{downsample_a.1} parent=0
    _
  %s7 = ssub.s32 1, %s5
  %s8 = scalar_select 0, %s7, %s5
  loop: start=0, step=1, limit=4
  $region2: #{downsample_a.1} parent=0 // loop_pre_header
    _
  $region3: #{downsample_a.1} parent=0 // loop_header
    %s10 = sphi 0, %s14
    %p11 = scmp.ge.s32.totalorder %s10, 4
    %s20 = sphi 0, %s22
    %s23 = sphi 0, %s20
    %s24 = sphi 0, %s23
    %s40 = sphi 0, %s24
    %s44 = sphi 0, %s44
    %s46 = sphi 0, %s44
    %s47 = sphi 0, %s46
    %s61 = sphi 0, %s47
    %s65 = sphi 0, %s65
    %s67 = sphi 0, %s65
    %s68 = sphi 0, %s67
    %s82 = sphi 0, %s68
    %s86 = sphi 0, %s86
    %s88 = sphi 0, %s86
    %s89 = sphi 0, %s88
    %s103 = sphi 0, %s89
    %s109 = sphi 0, %s111
    %s112 = sphi 0, %s109
    %s113 = sphi 0, %s112
    %s129 = sphi 0, %s113
  $region4: #{downsample_a.1} parent=0 // loop_header_branch
    %13 = sbr.rel (%p11) target = $region8
  $region5: #{downsample_a.1} parent=0 // loop_body
    %s15 = ssub.s32 %s10, 1
    %s16 = ssub.s32 %s10, 2
    %s17 = sadd.s32 %s10, 1
    %s18 = ssub.s32 %s10, %s17
    %p19 = scmp.eq.s32.totalorder %s18, 0
    %s21 = sadd.s32 %s20, 1
    %s22 = scalar_select %p19, %s20, %s21
    %p25 = pneg %p19
    %p26 = scmp.eq.s32.totalorder %s10, 1
    %p27 = por %p25, %p26
    %p28 = scmp.ne.s32.totalorder %s20, %s23
    %p29 = scmp.eq.s32.totalorder %s10, 0
    %p30 = por %p28, %p29
    %p31 = scmp.ne.s32.totalorder %s20, %s23
    %p32 = scmp.eq.s32.totalorder %s15, 1
    %p33 = por %p31, %p32
    %p34 = scmp.ne.s32.totalorder %s23, %s24
    %p35 = scmp.eq.s32.totalorder %s15, 0
    %p36 = por %p34, %p35
    %p37 = scmp.ne.s32.totalorder %s23, %s24
    %p38 = scmp.eq.s32.totalorder %s16, 1
    %p39 = por %p37, %p38
    %p41 = scmp.ne.s32.totalorder %s24, %s40
    %p42 = scmp.eq.s32.totalorder %s16, 0
    %p43 = por %p41, %p42
    %s45 = sadd.s32 %s44, 1
    %p48 = scmp.eq.s32.totalorder %s10, 1
    %p49 = scmp.ne.s32.totalorder %s44, %s46
    %p50 = scmp.eq.s32.totalorder %s10, 0
    %p51 = por %p49, %p50
    %p52 = scmp.ne.s32.totalorder %s44, %s46
    %p53 = scmp.eq.s32.totalorder %s15, 1
    %p54 = por %p52, %p53
    %p55 = scmp.ne.s32.totalorder %s46, %s47
    %p56 = scmp.eq.s32.totalorder %s15, 0
    %p57 = por %p55, %p56
    %p58 = scmp.ne.s32.totalorder %s46, %s47
    %p59 = scmp.eq.s32.totalorder %s16, 1
    %p60 = por %p58, %p59
    %p62 = scmp.ne.s32.totalorder %s47, %s61
    %p63 = scmp.eq.s32.totalorder %s16, 0
    %p64 = por %p62, %p63
    %s66 = sadd.s32 %s65, 1
    %p69 = scmp.eq.s32.totalorder %s10, 1
    %p70 = scmp.ne.s32.totalorder %s65, %s67
    %p71 = scmp.eq.s32.totalorder %s10, 0
    %p72 = por %p70, %p71
    %p73 = scmp.ne.s32.totalorder %s65, %s67
    %p74 = scmp.eq.s32.totalorder %s15, 1
    %p75 = por %p73, %p74
    %p76 = scmp.ne.s32.totalorder %s67, %s68
    %p77 = scmp.eq.s32.totalorder %s15, 0
    %p78 = por %p76, %p77
    %p79 = scmp.ne.s32.totalorder %s67, %s68
    %p80 = scmp.eq.s32.totalorder %s16, 1
    %p81 = por %p79, %p80
    %p83 = scmp.ne.s32.totalorder %s68, %s82
    %p84 = scmp.eq.s32.totalorder %s16, 0
    %p85 = por %p83, %p84
    %s87 = sadd.s32 %s86, 1
    %p90 = scmp.eq.s32.totalorder %s10, 1
    %p91 = scmp.ne.s32.totalorder %s86, %s88
    %p92 = scmp.eq.s32.totalorder %s10, 0
    %p93 = por %p91, %p92
    %p94 = scmp.ne.s32.totalorder %s86, %s88
    %p95 = scmp.eq.s32.totalorder %s15, 1
    %p96 = por %p94, %p95
    %p97 = scmp.ne.s32.totalorder %s88, %s89
    %p98 = scmp.eq.s32.totalorder %s15, 0
    %p99 = por %p97, %p98
    %p100 = scmp.ne.s32.totalorder %s88, %s89
    %p101 = scmp.eq.s32.totalorder %s16, 1
    %p102 = por %p100, %p101
    %p104 = scmp.ne.s32.totalorder %s89, %s103
    %p105 = scmp.eq.s32.totalorder %s16, 0
    %p106 = por %p104, %p105
    %s107 = ssub.s32 %s10, %s17
    %p108 = scmp.eq.s32.totalorder %s107, 0
    %s110 = sadd.s32 %s109, 1
    %s111 = scalar_select %p108, %s109, %s110
    %p114 = pneg %p108
    %p115 = scmp.eq.s32.totalorder %s10, 1
    %p116 = por %p114, %p115
    %p117 = scmp.ne.s32.totalorder %s109, %s112
    %p118 = scmp.eq.s32.totalorder %s10, 0
    %p119 = por %p117, %p118
    %p120 = scmp.ne.s32.totalorder %s109, %s112
    %p121 = scmp.eq.s32.totalorder %s15, 1
    %p122 = por %p120, %p121
    %p123 = scmp.ne.s32.totalorder %s112, %s113
    %p124 = scmp.eq.s32.totalorder %s15, 0
    %p125 = por %p123, %p124
    %p126 = scmp.ne.s32.totalorder %s112, %s113
    %p127 = scmp.eq.s32.totalorder %s16, 1
    %p128 = por %p126, %p127
    %p130 = scmp.ne.s32.totalorder %s113, %s129
    %p131 = scmp.eq.s32.totalorder %s16, 0
    %p132 = por %p130, %p131
    %p133 = scmp.le.s32.totalorder 1, %s10
    %p134 = scmp.lt.s32.totalorder %s10, 3
    %p135 = pnand %p133, %p134
    %p136 = pneg %p135
    // Predicated region
    $region9: #{downsample_a.1} parent=5 // pred_check
      _
    $region10: #{downsample_a.1} parent=5 // pred_check_branch
      %138 = sbr.rel (%p135) target = $region12
    $region11: #{downsample_a.1} parent=5 // pred_region
      %s139 = ssub.s32 %s10, 1
      // Predicated region
      $region13: #{downsample_a.1} parent=11 // pred_check
        %p140 = pneg %p57
      $region14: #{downsample_a.1} parent=11 // pred_check_branch
        %142 = sbr.rel (%p140) target = $region16
      $region15: #{downsample_a.1} parent=11 // pred_region
        _
      $region16: #{downsample_a.1} parent=11 // pred_fallthru
        _
      // Predicated region
      $region17: #{downsample_a.1} parent=11 // pred_check
        %p143 = pneg %p78
      $region18: #{downsample_a.1} parent=11 // pred_check_branch
        %145 = sbr.rel (%p143) target = $region20
      $region19: #{downsample_a.1} parent=11 // pred_region
        _
      $region20: #{downsample_a.1} parent=11 // pred_fallthru
        _
      // Predicated region
      $region21: #{downsample_a.1} parent=11 // pred_check
        %p146 = pneg %p99
      $region22: #{downsample_a.1} parent=11 // pred_check_branch
        %148 = sbr.rel (%p146) target = $region24
      $region23: #{downsample_a.1} parent=11 // pred_region
        _
      $region24: #{downsample_a.1} parent=11 // pred_fallthru
        _
    $region12: #{downsample_a.1} parent=5 // pred_fallthru
      _
    %p149 = scmp.lt.s32.totalorder %s10, 2
    // Predicated region
    $region25: #{downsample_a.1} parent=5 // pred_check
      %p150 = pneg %p149
    $region26: #{downsample_a.1} parent=5 // pred_check_branch
      %152 = sbr.rel (%p150) target = $region28
    $region27: #{downsample_a.1} parent=5 // pred_region
      // Predicated region
      $region29: #{downsample_a.1} parent=27 // pred_check
        %p153 = pneg %p30
      $region30: #{downsample_a.1} parent=27 // pred_check_branch
        %155 = sbr.rel (%p153) target = $region32
      $region31: #{downsample_a.1} parent=27 // pred_region
        %p156 = scmp.lt.s32.totalorder %s10, 1
        %s157 = scalar_select %p156, %s10, 1
        %s158 = smul.addr %s157, 8
        %s159 = smul.addr %s158, 8
        %s160 = scalar_lea.vmem %s0, %s159
      $region32: #{downsample_a.1} parent=27 // pred_fallthru
        _
    $region28: #{downsample_a.1} parent=5 // pred_fallthru
      _
    %p161 = scmp.le.s32.totalorder 1, %s10
    %p162 = scmp.lt.s32.totalorder %s10, 3
    %p163 = pnand %p161, %p162
    %p164 = pneg %p163
    // Predicated region
    $region33: #{downsample_a.1} parent=5 // pred_check
      _
    $region34: #{downsample_a.1} parent=5 // pred_check_branch
      %166 = sbr.rel (%p163) target = $region36
    $region35: #{downsample_a.1} parent=5 // pred_region
      %s167 = ssub.s32 %s10, 1
      %p168 = scmp.lt.s32.totalorder %s15, 1
      %s169 = scalar_select %p168, %s15, 1
      %s170 = smul.addr %s169, 8
      %s171 = smul.addr %s170, 8
      %s172 = scalar_lea.vmem %s0, %s171
      %p173 = pneg %p36
      %p174 = pneg %p33
      %p175 = pneg %p57
      %p176 = pneg %p54
      %p177 = pneg %p78
      %p178 = pneg %p75
      %p179 = pneg %p99
      %p180 = pneg %p96
      %p181 = pneg %p125
      %p182 = pneg %p122
      %p183 = scmp.lt.s32.totalorder %s15, 1
      %s184 = scalar_select %p183, %s15, 1
      %s185 = smul.addr %s184, 8
      %s186 = smul.addr %s185, 8
      %s187 = scalar_lea.vmem %s4, %s186
      %p188 = scmp.lt.s32.totalorder %s15, 1
      %s189 = scalar_select %p188, %s15, 1
      %s190 = smul.addr %s189, 8
      %s191 = smul.addr %s190, 8
      %s192 = scalar_lea.vmem %s0, %s191
      %p193 = scmp.lt.s32.totalorder %s15, 1
      %s194 = scalar_select %p193, %s15, 1
      %s195 = smul.addr %s194, 8
      %s196 = smul.addr %s195, 8
      %s197 = scalar_lea.vmem %s4, %s196
      %v199 = vld [vmem:[%s192] sm:$0xff]
      %v200 = vld [vmem:[%s192 + $0x8] sm:$0xff]
      %v201 = vld [vmem:[%s192 + $0x10] sm:$0xff]
      %v202 = vld [vmem:[%s192 + $0x18] sm:$0xff]
      %v203 = vld [vmem:[%s192 + $0x20] sm:$0xff]
      %v204 = vld [vmem:[%s192 + $0x28] sm:$0xff]
      %v205 = vld [vmem:[%s192 + $0x30] sm:$0xff]
      %v206 = vld [vmem:[%s192 + $0x38] sm:$0xff]
      %v207 = vld [vmem:[%s1] sm:$0x1]
      %v209 = vlaneseq
      %v210 = vshrl.u32 %v209, 7
      %v211 = vsub.s32 0, %v210
      %v212 = vrot.slane %v207, %v211
      %v214 = vmul.f32 %v199, %v212
      %v215 = vmul.f32 %v200, %v212
      %v216 = vmul.f32 %v201, %v212
      %v217 = vmul.f32 %v202, %v212
      %v218 = vmul.f32 %v203, %v212
      %v219 = vmul.f32 %v204, %v212
      %v220 = vmul.f32 %v205, %v212
      %v221 = vmul.f32 %v206, %v212
      %v222 = vld [vmem:[%s2] sm:$0x1]
      %v224 = vlaneseq
      %v225 = vshrl.u32 %v224, 7
      %v226 = vsub.s32 0, %v225
      %v227 = vrot.slane %v222, %v226
      %v229 = vadd.f32 %v214, %v227
      %v230 = vadd.f32 %v215, %v227
      %v231 = vadd.f32 %v216, %v227
      %v232 = vadd.f32 %v217, %v227
      %v233 = vadd.f32 %v218, %v227
      %v234 = vadd.f32 %v219, %v227
      %v235 = vadd.f32 %v220, %v227
      %v236 = vadd.f32 %v221, %v227
      %v237 = vmax.f32 %v229, 0.0
      %v238 = vmax.f32 %v230, 0.0
      %v239 = vmax.f32 %v231, 0.0
      %v240 = vmax.f32 %v232, 0.0
      %v241 = vmax.f32 %v233, 0.0
      %v242 = vmax.f32 %v234, 0.0
      %v243 = vmax.f32 %v235, 0.0
      %v244 = vmax.f32 %v236, 0.0
      %vm245 = vcmask 130048
      %246 = vst.msk [vmem:[#allocation2] sm:$0xff] %vm245, 0.0
      %vm247 = vcmask 122880
      %248 = vst.msk [vmem:[#allocation2 + $0x8] sm:$0x1] %vm247, 0.0
      %s249 = scalar_lea.vmem [#allocation2], 128
      %250 = vst.msk [vmem:[%s249] sm:$0xff] %vm245, 0.0
      %251 = vst.msk [vmem:[%s249 + $0x8] sm:$0x1] %vm247, 0.0
      %252 = vst.msk [vmem:[#allocation2] sm:$0x1] %vm247, 0.0
      %253 = vst.msk [vmem:[#allocation2 + $0x10] sm:$0x1] %vm247, 0.0
      %254 = vst.msk [vmem:[#allocation2 + $0x20] sm:$0x1] %vm247, 0.0
      %255 = vst.msk [vmem:[#allocation2 + $0x30] sm:$0x1] %vm247, 0.0
      %256 = vst.msk [vmem:[#allocation2 + $0x40] sm:$0x1] %vm247, 0.0
      %257 = vst.msk [vmem:[#allocation2 + $0x50] sm:$0x1] %vm247, 0.0
      %258 = vst.msk [vmem:[#allocation2 + $0x60] sm:$0x1] %vm247, 0.0
      %259 = vst.msk [vmem:[#allocation2 + $0x70] sm:$0x1] %vm247, 0.0
      %260 = vst.msk [vmem:[#allocation2 + $0x80] sm:$0x1] %vm247, 0.0
      %261 = vst.msk [vmem:[#allocation2 + $0x8] sm:$0x1] %vm247, 0.0
      %262 = vst.msk [vmem:[#allocation2 + $0x18] sm:$0x1] %vm247, 0.0
      %263 = vst.msk [vmem:[#allocation2 + $0x28] sm:$0x1] %vm247, 0.0
      %264 = vst.msk [vmem:[#allocation2 + $0x38] sm:$0x1] %vm247, 0.0
      %265 = vst.msk [vmem:[#allocation2 + $0x48] sm:$0x1] %vm247, 0.0
      %266 = vst.msk [vmem:[#allocation2 + $0x58] sm:$0x1] %vm247, 0.0
      %267 = vst.msk [vmem:[#allocation2 + $0x68] sm:$0x1] %vm247, 0.0
      %268 = vst.msk [vmem:[#allocation2 + $0x78] sm:$0x1] %vm247, 0.0
      %269 = vst.msk [vmem:[#allocation2 + $0x88] sm:$0x1] %vm247, 0.0
      %278 = vrot.lane.b32.xlu0 %v237, 116
      %v279 = vpop.permute.xlu0 %278
      %280 = vrot.lane.b32.xlu0 %v238, 116
      %v281 = vpop.permute.xlu0 %280
      %282 = vrot.lane.b32.xlu0 %v239, 116
      %v283 = vpop.permute.xlu0 %282
      %284 = vrot.lane.b32.xlu0 %v240, 116
      %v285 = vpop.permute.xlu0 %284
      %286 = vrot.lane.b32.xlu0 %v241, 116
      %v287 = vpop.permute.xlu0 %286
      %288 = vrot.lane.b32.xlu0 %v242, 116
      %v289 = vpop.permute.xlu0 %288
      %290 = vrot.lane.b32.xlu0 %v243, 116
      %v291 = vpop.permute.xlu0 %290
      %292 = vrot.lane.b32.xlu0 %v244, 116
      %v293 = vpop.permute.xlu0 %292
      %s302 = scalar_lea.vmem [#allocation2], 16
      %vm303 = vcmask 31744
      %304 = vst.msk [vmem:[%s302 + $0x1] sm:$0xff] %vm303, %v279
      %305 = vst.msk [vmem:[%s302 + $0x11] sm:$0xff] %vm303, %v281
      %306 = vst.msk [vmem:[%s302 + $0x21] sm:$0xff] %vm303, %v283
      %307 = vst.msk [vmem:[%s302 + $0x31] sm:$0xff] %vm303, %v285
      %308 = vst.msk [vmem:[%s302 + $0x41] sm:$0xff] %vm303, %v287
      %309 = vst.msk [vmem:[%s302 + $0x51] sm:$0xff] %vm303, %v289
      %310 = vst.msk [vmem:[%s302 + $0x61] sm:$0xff] %vm303, %v291
      %311 = vst.msk [vmem:[%s302 + $0x71] sm:$0xff] %vm303, %v293
      %312 = vrot.lane.b32.xlu0 %v237, 124
      %v313 = vpop.permute.xlu0 %312
      %314 = vrot.lane.b32.xlu0 %v238, 124
      %v315 = vpop.permute.xlu0 %314
      %316 = vrot.lane.b32.xlu0 %v239, 124
      %v317 = vpop.permute.xlu0 %316
      %318 = vrot.lane.b32.xlu0 %v240, 124
      %v319 = vpop.permute.xlu0 %318
      %320 = vrot.lane.b32.xlu0 %v241, 124
      %v321 = vpop.permute.xlu0 %320
      %322 = vrot.lane.b32.xlu0 %v242, 124
      %v323 = vpop.permute.xlu0 %322
      %324 = vrot.lane.b32.xlu0 %v243, 124
      %v325 = vpop.permute.xlu0 %324
      %326 = vrot.lane.b32.xlu0 %v244, 124
      %v327 = vpop.permute.xlu0 %326
      %vm336 = vcmask 64544
      %337 = vst.msk [vmem:[%s302] sm:$0xff] %vm336, %v313
      %338 = vst.msk [vmem:[%s302 + $0x10] sm:$0xff] %vm336, %v315
      %339 = vst.msk [vmem:[%s302 + $0x20] sm:$0xff] %vm336, %v317
      %340 = vst.msk [vmem:[%s302 + $0x30] sm:$0xff] %vm336, %v319
      %341 = vst.msk [vmem:[%s302 + $0x40] sm:$0xff] %vm336, %v321
      %342 = vst.msk [vmem:[%s302 + $0x50] sm:$0xff] %vm336, %v323
      %343 = vst.msk [vmem:[%s302 + $0x60] sm:$0xff] %vm336, %v325
      %344 = vst.msk [vmem:[%s302 + $0x70] sm:$0xff] %vm336, %v327
      %345 = vrot.lane.b32.xlu0 %v237, 4
      %v346 = vpop.permute.xlu0 %345
      %347 = vrot.lane.b32.xlu0 %v238, 4
      %v348 = vpop.permute.xlu0 %347
      %349 = vrot.lane.b32.xlu0 %v239, 4
      %v350 = vpop.permute.xlu0 %349
      %351 = vrot.lane.b32.xlu0 %v240, 4
      %v352 = vpop.permute.xlu0 %351
      %353 = vrot.lane.b32.xlu0 %v241, 4
      %v354 = vpop.permute.xlu0 %353
      %355 = vrot.lane.b32.xlu0 %v242, 4
      %v356 = vpop.permute.xlu0 %355
      %357 = vrot.lane.b32.xlu0 %v243, 4
      %v358 = vpop.permute.xlu0 %357
      %359 = vrot.lane.b32.xlu0 %v244, 4
      %v360 = vpop.permute.xlu0 %359
      %vm369 = vcmask 97344
      %370 = vst.msk [vmem:[#allocation2 + $0x1] sm:$0xff] %vm369, %v346
      %371 = vst.msk [vmem:[#allocation2 + $0x11] sm:$0xff] %vm369, %v348
      %372 = vst.msk [vmem:[#allocation2 + $0x21] sm:$0xff] %vm369, %v350
      %373 = vst.msk [vmem:[#allocation2 + $0x31] sm:$0xff] %vm369, %v352
      %374 = vst.msk [vmem:[#allocation2 + $0x41] sm:$0xff] %vm369, %v354
      %375 = vst.msk [vmem:[#allocation2 + $0x51] sm:$0xff] %vm369, %v356
      %376 = vst.msk [vmem:[#allocation2 + $0x61] sm:$0xff] %vm369, %v358
      %377 = vst.msk [vmem:[#allocation2 + $0x71] sm:$0xff] %vm369, %v360
      %378 = vrot.lane.b32.xlu0 %v237, 12
      %v379 = vpop.permute.xlu0 %378
      %380 = vrot.lane.b32.xlu0 %v238, 12
      %v381 = vpop.permute.xlu0 %380
      %382 = vrot.lane.b32.xlu0 %v239, 12
      %v383 = vpop.permute.xlu0 %382
      %384 = vrot.lane.b32.xlu0 %v240, 12
      %v385 = vpop.permute.xlu0 %384
      %386 = vrot.lane.b32.xlu0 %v241, 12
      %v387 = vpop.permute.xlu0 %386
      %388 = vrot.lane.b32.xlu0 %v242, 12
      %v389 = vpop.permute.xlu0 %388
      %390 = vrot.lane.b32.xlu0 %v243, 12
      %v391 = vpop.permute.xlu0 %390
      %392 = vrot.lane.b32.xlu0 %v244, 12
      %v393 = vpop.permute.xlu0 %392
      %vm402 = vcmask 130144
      %403 = vst.msk [vmem:[#allocation2] sm:$0xff] %vm402, %v379
      %404 = vst.msk [vmem:[#allocation2 + $0x10] sm:$0xff] %vm402, %v381
      %405 = vst.msk [vmem:[#allocation2 + $0x20] sm:$0xff] %vm402, %v383
      %406 = vst.msk [vmem:[#allocation2 + $0x30] sm:$0xff] %vm402, %v385
      %407 = vst.msk [vmem:[#allocation2 + $0x40] sm:$0xff] %vm402, %v387
      %408 = vst.msk [vmem:[#allocation2 + $0x50] sm:$0xff] %vm402, %v389
      %409 = vst.msk [vmem:[#allocation2 + $0x60] sm:$0xff] %vm402, %v391
      %410 = vst.msk [vmem:[#allocation2 + $0x70] sm:$0xff] %vm402, %v393
      %v411 = vld [vmem:[#allocation2] sm:$0xff]
      %v412 = vld [vmem:[#allocation2 + $0x10] sm:$0xff]
      %v413 = vld [vmem:[#allocation2 + $0x20] sm:$0xff]
      %v414 = vld [vmem:[#allocation2 + $0x30] sm:$0xff]
      %v415 = vld [vmem:[#allocation2 + $0x40] sm:$0xff]
      %v416 = vld [vmem:[#allocation2 + $0x50] sm:$0xff]
      %v417 = vld [vmem:[#allocation2 + $0x60] sm:$0xff]
      %v418 = vld [vmem:[#allocation2 + $0x70] sm:$0xff]
      %419 = vst.msk [vmem:[#allocation3] sm:$0xff] %vm245, %v411
      %420 = vst.msk [vmem:[#allocation3 + $0x8] sm:$0xff] %vm245, %v412
      %421 = vst.msk [vmem:[#allocation3 + $0x10] sm:$0xff] %vm245, %v413
      %422 = vst.msk [vmem:[#allocation3 + $0x18] sm:$0xff] %vm245, %v414
      %423 = vst.msk [vmem:[#allocation3 + $0x20] sm:$0xff] %vm245, %v415
      %424 = vst.msk [vmem:[#allocation3 + $0x28] sm:$0xff] %vm245, %v416
      %425 = vst.msk [vmem:[#allocation3 + $0x30] sm:$0xff] %vm245, %v417
      %426 = vst.msk [vmem:[#allocation3 + $0x38] sm:$0xff] %vm245, %v418
      %v427 = vld [vmem:[#allocation2 + $0x1] sm:$0xff]
      %v428 = vld [vmem:[#allocation2 + $0x11] sm:$0xff]
      %v429 = vld [vmem:[#allocation2 + $0x21] sm:$0xff]
      %v430 = vld [vmem:[#allocation2 + $0x31] sm:$0xff]
      %v431 = vld [vmem:[#allocation2 + $0x41] sm:$0xff]
      %v432 = vld [vmem:[#allocation2 + $0x51] sm:$0xff]
      %v433 = vld [vmem:[#allocation2 + $0x61] sm:$0xff]
      %v434 = vld [vmem:[#allocation2 + $0x71] sm:$0xff]
      %443 = vrot.lane.b32.xlu0 %v427, 16
      %v444 = vpop.permute.xlu0 %443
      %445 = vrot.lane.b32.xlu0 %v428, 16
      %v446 = vpop.permute.xlu0 %445
      %447 = vrot.lane.b32.xlu0 %v429, 16
      %v448 = vpop.permute.xlu0 %447
      %449 = vrot.lane.b32.xlu0 %v430, 16
      %v450 = vpop.permute.xlu0 %449
      %451 = vrot.lane.b32.xlu0 %v431, 16
      %v452 = vpop.permute.xlu0 %451
      %453 = vrot.lane.b32.xlu0 %v432, 16
      %v454 = vpop.permute.xlu0 %453
      %455 = vrot.lane.b32.xlu0 %v433, 16
      %v456 = vpop.permute.xlu0 %455
      %457 = vrot.lane.b32.xlu0 %v434, 16
      %v458 = vpop.permute.xlu0 %457
      %vm467 = vcmask 261248
      %468 = vst.msk [vmem:[#allocation3] sm:$0xff] %vm467, %v444
      %469 = vst.msk [vmem:[#allocation3 + $0x8] sm:$0xff] %vm467, %v446
      %470 = vst.msk [vmem:[#allocation3 + $0x10] sm:$0xff] %vm467, %v448
      %471 = vst.msk [vmem:[#allocation3 + $0x18] sm:$0xff] %vm467, %v450
      %472 = vst.msk [vmem:[#allocation3 + $0x20] sm:$0xff] %vm467, %v452
      %473 = vst.msk [vmem:[#allocation3 + $0x28] sm:$0xff] %vm467, %v454
      %474 = vst.msk [vmem:[#allocation3 + $0x30] sm:$0xff] %vm467, %v456
      %475 = vst.msk [vmem:[#allocation3 + $0x38] sm:$0xff] %vm467, %v458
      %v476 = vld [vmem:[%s302] sm:$0xff]
      %v477 = vld [vmem:[%s302 + $0x10] sm:$0xff]
      %v478 = vld [vmem:[%s302 + $0x20] sm:$0xff]
      %v479 = vld [vmem:[%s302 + $0x30] sm:$0xff]
      %v480 = vld [vmem:[%s302 + $0x40] sm:$0xff]
      %v481 = vld [vmem:[%s302 + $0x50] sm:$0xff]
      %v482 = vld [vmem:[%s302 + $0x60] sm:$0xff]
      %v483 = vld [vmem:[%s302 + $0x70] sm:$0xff]
      %492 = vrot.lane.b32.xlu0 %v476, 32
      %v493 = vpop.permute.xlu0 %492
      %494 = vrot.lane.b32.xlu0 %v477, 32
      %v495 = vpop.permute.xlu0 %494
      %496 = vrot.lane.b32.xlu0 %v478, 32
      %v497 = vpop.permute.xlu0 %496
      %498 = vrot.lane.b32.xlu0 %v479, 32
      %v499 = vpop.permute.xlu0 %498
      %500 = vrot.lane.b32.xlu0 %v480, 32
      %v501 = vpop.permute.xlu0 %500
      %502 = vrot.lane.b32.xlu0 %v481, 32
      %v503 = vpop.permute.xlu0 %502
      %504 = vrot.lane.b32.xlu0 %v482, 32
      %v505 = vpop.permute.xlu0 %504
      %506 = vrot.lane.b32.xlu0 %v483, 32
      %v507 = vpop.permute.xlu0 %506
      %vm516 = vcmask 392448
      %517 = vst.msk [vmem:[#allocation3] sm:$0xff] %vm516, %v493
      %518 = vst.msk [vmem:[#allocation3 + $0x8] sm:$0xff] %vm516, %v495
      %519 = vst.msk [vmem:[#allocation3 + $0x10] sm:$0xff] %vm516, %v497
      %520 = vst.msk [vmem:[#allocation3 + $0x18] sm:$0xff] %vm516, %v499
      %521 = vst.msk [vmem:[#allocation3 + $0x20] sm:$0xff] %vm516, %v501
      %522 = vst.msk [vmem:[#allocation3 + $0x28] sm:$0xff] %vm516, %v503
      %523 = vst.msk [vmem:[#allocation3 + $0x30] sm:$0xff] %vm516, %v505
      %524 = vst.msk [vmem:[#allocation3 + $0x38] sm:$0xff] %vm516, %v507
      %v525 = vld [vmem:[%s302 + $0x1] sm:$0xff]
      %v526 = vld [vmem:[%s302 + $0x11] sm:$0xff]
      %v527 = vld [vmem:[%s302 + $0x21] sm:$0xff]
      %v528 = vld [vmem:[%s302 + $0x31] sm:$0xff]
      %v529 = vld [vmem:[%s302 + $0x41] sm:$0xff]
      %v530 = vld [vmem:[%s302 + $0x51] sm:$0xff]
      %v531 = vld [vmem:[%s302 + $0x61] sm:$0xff]
      %v532 = vld [vmem:[%s302 + $0x71] sm:$0xff]
      %541 = vrot.lane.b32.xlu0 %v525, 48
      %v542 = vpop.permute.xlu0 %541
      %543 = vrot.lane.b32.xlu0 %v526, 48
      %v544 = vpop.permute.xlu0 %543
      %545 = vrot.lane.b32.xlu0 %v527, 48
      %v546 = vpop.permute.xlu0 %545
      %547 = vrot.lane.b32.xlu0 %v528, 48
      %v548 = vpop.permute.xlu0 %547
      %549 = vrot.lane.b32.xlu0 %v529, 48
      %v550 = vpop.permute.xlu0 %549
      %551 = vrot.lane.b32.xlu0 %v530, 48
      %v552 = vpop.permute.xlu0 %551
      %553 = vrot.lane.b32.xlu0 %v531, 48
      %v554 = vpop.permute.xlu0 %553
      %555 = vrot.lane.b32.xlu0 %v532, 48
      %v556 = vpop.permute.xlu0 %555
      %vm565 = vcmask 523648
      %566 = vst.msk [vmem:[#allocation3] sm:$0xff] %vm565, %v542
      %567 = vst.msk [vmem:[#allocation3 + $0x8] sm:$0xff] %vm565, %v544
      %568 = vst.msk [vmem:[#allocation3 + $0x10] sm:$0xff] %vm565, %v546
      %569 = vst.msk [vmem:[#allocation3 + $0x18] sm:$0xff] %vm565, %v548
      %570 = vst.msk [vmem:[#allocation3 + $0x20] sm:$0xff] %vm565, %v550
      %571 = vst.msk [vmem:[#allocation3 + $0x28] sm:$0xff] %vm565, %v552
      %572 = vst.msk [vmem:[#allocation3 + $0x30] sm:$0xff] %vm565, %v554
      %573 = vst.msk [vmem:[#allocation3 + $0x38] sm:$0xff] %vm565, %v556
      %v574 = vld [vmem:[#allocation3] sm:$0xff]
      %v575 = vld [vmem:[#allocation3 + $0x8] sm:$0xff]
      %v576 = vld [vmem:[#allocation3 + $0x10] sm:$0xff]
      %v577 = vld [vmem:[#allocation3 + $0x18] sm:$0xff]
      %v578 = vld [vmem:[#allocation3 + $0x20] sm:$0xff]
      %v579 = vld [vmem:[#allocation3 + $0x28] sm:$0xff]
      %v580 = vld [vmem:[#allocation3 + $0x30] sm:$0xff]
      %v581 = vld [vmem:[#allocation3 + $0x38] sm:$0xff]
      %v582 = vpack.c.bf16 %v575, %v574
      %v583 = vpack.c.bf16 %v577, %v576
      %v584 = vpack.c.bf16 %v579, %v578
      %v585 = vpack.c.bf16 %v581, %v580
      %v586 = vld [vmem:[%s3] sm:$0xf]
      %v587 = vld [vmem:[%s3 + $0x4] sm:$0xf]
      %v588 = vld [vmem:[%s3 + $0x8] sm:$0xf]
      %v589 = vld [vmem:[%s3 + $0xc] sm:$0xf]
      %v590 = vld [vmem:[%s3 + $0x10] sm:$0xf]
      %v591 = vld [vmem:[%s3 + $0x14] sm:$0xf]
      %v592 = vld [vmem:[%s3 + $0x18] sm:$0xf]
      %v593 = vld [vmem:[%s3 + $0x1c] sm:$0xf]
      %v602 = vunpack.c.l.b16 %v586
      %v603 = vunpack.c.l.b16 %v587
      %v604 = vunpack.c.l.b16 %v588
      %v605 = vunpack.c.l.b16 %v589
      %v606 = vunpack.c.l.b16 %v590
      %v607 = vunpack.c.l.b16 %v591
      %v608 = vunpack.c.l.b16 %v592
      %v609 = vunpack.c.l.b16 %v593
      %v610 = vpack.c.b16 %v603, %v602
      %v611 = vpack.c.b16 %v605, %v604
      %v612 = vpack.c.b16 %v607, %v606
      %v613 = vpack.c.b16 %v609, %v608
      %vm618 = vcmask 523264
      %v620 = vsel %vm618, %v582, 0
      %v623 = vsel %vm618, %v583, 0
      %v626 = vsel %vm618, %v584, 0
      %v629 = vsel %vm618, %v585, 0
      %631 = vmatprep.subr.bf16.mxu0 0
      %632 = vmatpush1.bf16.msra.mxu0 0
      %633 = vmatprep.subr.bf16.mxu0 0
      %634 = vmatpush1.bf16.msra.mxu0 0
      %635 = vmatprep.subr.bf16.mxu0 0
      %636 = vmatpush1.bf16.msra.mxu0 0
      %637 = vmatprep.subr.bf16.mxu0 0
      %638 = vmatpush1.bf16.msra.mxu0 0
      %639 = vmatprep.subr.bf16.mxu0 0
      %640 = vmatpush1.bf16.msra.mxu0 %v613
      %641 = vmatprep.subr.bf16.mxu0 0
      %642 = vmatpush1.bf16.msra.mxu0 %v612
      %643 = vmatprep.subr.bf16.mxu0 0
      %644 = vmatpush1.bf16.msra.mxu0 %v611
      %645 = vmatprep.subr.bf16.mxu0 0
      %646 = vmatpush1.bf16.msra.mxu0 %v610
      %647 = vmatprep.subr.bf16.mxu0 0
      %648 = vmatpush2.bf16.msra.mxu0 0
      %649 = vmatprep.subr.bf16.mxu0 0
      %650 = vmatpush2.bf16.msra.mxu0 0
      %651 = vmatprep.subr.bf16.mxu0 0
      %652 = vmatpush2.bf16.msra.mxu0 0
      %653 = vmatprep.subr.bf16.mxu0 0
      %654 = vmatpush2.bf16.msra.mxu0 0
      %655 = vmatprep.subr.bf16.mxu0 0
      %656 = vmatpush2.bf16.msra.mxu0 0
      %657 = vmatprep.subr.bf16.mxu0 0
      %658 = vmatpush2.bf16.msra.mxu0 0
      %659 = vmatprep.subr.bf16.mxu0 0
      %660 = vmatpush2.bf16.msra.mxu0 0
      %661 = vmatprep.subr.bf16.mxu0 0
      %662 = vmatpush2.bf16.msra.mxu0 0
      %663 = vmatprep.mubr.bf16.mxu0 0
      %664 = vmatmul.mubr.bf16.gmra.mxu0 %v620
      %v665 = vpop.f32.mrf.mxu0
      %v666 = vadd.f32 0.0, %v665
      %v667 = vpop.f32.mrf.mxu0
      %v668 = vpop.f32.mrf.mxu0
      %v669 = vadd.f32 0.0, %v668
      %v670 = vpop.f32.mrf.mxu0
      %671 = vmatprep.mubr.bf16.mxu0 0
      %672 = vmatmul.mubr.bf16.gmra.mxu0 %v623
      %v673 = vpop.f32.mrf.mxu0
      %v674 = vadd.f32 0.0, %v673
      %v675 = vpop.f32.mrf.mxu0
      %v676 = vpop.f32.mrf.mxu0
      %v677 = vadd.f32 0.0, %v676
      %v678 = vpop.f32.mrf.mxu0
      %679 = vmatprep.mubr.bf16.mxu0 0
      %680 = vmatmul.mubr.bf16.gmra.mxu0 %v626
      %v681 = vpop.f32.mrf.mxu0
      %v682 = vadd.f32 0.0, %v681
      %v683 = vpop.f32.mrf.mxu0
      %v684 = vpop.f32.mrf.mxu0
      %v685 = vadd.f32 0.0, %v684
      %v686 = vpop.f32.mrf.mxu0
      %687 = vmatprep.mubr.bf16.mxu0 0
      %688 = vmatmul.mubr.bf16.gmra.mxu0 %v629
      %v689 = vpop.f32.mrf.mxu0
      %v690 = vadd.f32 0.0, %v689
      %v691 = vpop.f32.mrf.mxu0
      %v692 = vpop.f32.mrf.mxu0
      %v693 = vadd.f32 0.0, %v692
      %v694 = vpop.f32.mrf.mxu0
      %695 = vdwg.mxu0
      %vm696 = vcmask 64512
      %697 = vst.msk [vmem:[%s197] sm:$0xff] %vm696, %v666
      %698 = vst.msk [vmem:[%s197 + $0x8] sm:$0xff] %vm696, %v669
      %699 = vst.msk [vmem:[%s197 + $0x10] sm:$0xff] %vm696, %v674
      %700 = vst.msk [vmem:[%s197 + $0x18] sm:$0xff] %vm696, %v677
      %701 = vst.msk [vmem:[%s197 + $0x20] sm:$0xff] %vm696, %v682
      %702 = vst.msk [vmem:[%s197 + $0x28] sm:$0xff] %vm696, %v685
      %703 = vst.msk [vmem:[%s197 + $0x30] sm:$0xff] %vm696, %v690
      %704 = vst.msk [vmem:[%s197 + $0x38] sm:$0xff] %vm696, %v693
      %p705 = scmp.lt.s32.totalorder %s15, 1
      %s706 = scalar_select %p705, %s15, 1
      %s707 = smul.addr %s706, 8
      %s708 = smul.addr %s707, 8
      %s709 = scalar_lea.vmem %s4, %s708
      // Predicated region
      $region37: #{downsample_a.1} parent=35 // pred_check
        %p710 = pneg %p122
      $region38: #{downsample_a.1} parent=35 // pred_check_branch
        %712 = sbr.rel (%p710) target = $region40
      $region39: #{downsample_a.1} parent=35 // pred_region
        _
      $region40: #{downsample_a.1} parent=35 // pred_fallthru
        _
    $region36: #{downsample_a.1} parent=5 // pred_fallthru
      _
    %p713 = scmp.le.s32.totalorder 2, %s10
    // Predicated region
    $region41: #{downsample_a.1} parent=5 // pred_check
      %p714 = pneg %p713
    $region42: #{downsample_a.1} parent=5 // pred_check_branch
      %716 = sbr.rel (%p714) target = $region44
    $region43: #{downsample_a.1} parent=5 // pred_region
      %s717 = ssub.s32 %s10, 2
      // Predicated region
      $region45: #{downsample_a.1} parent=43 // pred_check
        %p718 = pneg %p128
      $region46: #{downsample_a.1} parent=43 // pred_check_branch
        %720 = sbr.rel (%p718) target = $region48
      $region47: #{downsample_a.1} parent=43 // pred_region
        %p721 = scmp.lt.s32.totalorder %s16, 1
        %s722 = scalar_select %p721, %s16, 1
        %s723 = smul.addr %s722, 8
        %s724 = smul.addr %s723, 8
        %s725 = scalar_lea.vmem %s4, %s724
      $region48: #{downsample_a.1} parent=43 // pred_fallthru
        _
    $region44: #{downsample_a.1} parent=5 // pred_fallthru
      _
  $region6: #{downsample_a.1} parent=0 // loop_footer
    %s14 = sadd.s32 1, %s10
  $region7: #{downsample_a.1} parent=0 // loop_footer_branch
    %9 = sbr.rel target = $region3
  $region8: #{downsample_a.1} parent=0 // loop_exit
    _

</llo_original>
